<compile_context>
chip_gen: v6e
topology: v6e:2x2x1
jax: 0.10.0
libtpu: 0.0.40
codegen_flags: <defaults>
</compile_context>

<pallas_src>
import functools

import jax
import jax.numpy as jnp
from jax import lax
from jax.experimental import pallas as pl
from jax.experimental.pallas import tpu as pltpu

EPS = 1e-5
_LANE = 128
_SUBLANE = 8
_MIB = 1024 * 1024


def _round_up(x, m):
    return ((x + m - 1) // m) * m


def _vmem_limit_bytes():
    """Generation-aware scoped-VMEM limit (v7x has only 64 MiB physical)."""
    try:
        cap = int(pltpu.get_tpu_info().vmem_capacity_bytes)
    except Exception:  # pragma: no cover - defensive fallback
        cap = 128 * _MIB
    # >= 32 MiB (above v5e's 16 MiB scoped default), well under physical.
    return max(32 * _MIB, min(int(0.75 * cap), cap - 16 * _MIB))


def _per_elem_bytes(in_dtype, out_dtype):
    # 2x double-buffered input + 2x double-buffered output + ~2 live f32
    # intermediates inside the kernel.
    return 2 * jnp.dtype(in_dtype).itemsize + 2 * jnp.dtype(out_dtype).itemsize + 8


def _choose_tiles(n, c, in_dtype, out_dtype, vmem_limit, row_tile_override=None):
    """Returns (mode, tile_rows, tile_cols)."""
    c_lane = _round_up(c, _LANE)
    per_elem = _per_elem_bytes(in_dtype, out_dtype)
    budget = int(0.7 * vmem_limit)  # headroom for gamma/beta/stats/scratch

    # Widest multiple-of-128 lane strip such that the full batch fits VMEM.
    max_tc = (budget // (per_elem * max(n, 1))) // _LANE * _LANE

    if row_tile_override is None and max_tc >= _LANE:
        # --- single-pass path: whole batch resident per feature tile ---
        if c <= _LANE:
            tc = c  # single tile, full (and only) feature extent
        else:
            tc = min(max_tc, c_lane)
            # Guarantee >= 2 grid steps so both v7x TensorCores get work.
            if c_lane >= 2 * _LANE:
                tc = min(tc, _round_up(c_lane // 2, _LANE))
        return "one_pass", n, tc

    # --- two-pass path: tile the batch dimension as well ---
    tc = min(512, c_lane) if c > _LANE else c
    if row_tile_override is not None:
        tn = _round_up(max(int(row_tile_override), _SUBLANE), _SUBLANE)
    else:
        tn = (budget // (per_elem * max(tc, _LANE))) // _SUBLANE * _SUBLANE
        tn = max(_SUBLANE, tn)
    tn = min(tn, _round_up(n, _SUBLANE))
    return "two_pass", tn, tc


# ----------------------------- kernels ------------------------------------


def _bn1d_onepass_kernel(x_ref, gamma_ref, beta_ref, o_ref):
    """Full-batch (N, TC) column strip resident in VMEM; reduce over batch."""
    x = x_ref[...].astype(jnp.float32)                      # (N, TC)
    mean = jnp.mean(x, axis=0, keepdims=True)               # (1, TC)
    d = x - mean
    var = jnp.mean(d * d, axis=0, keepdims=True)            # biased variance
    scale = lax.rsqrt(var + EPS) * gamma_ref[...].astype(jnp.float32)
    beta = beta_ref[...].astype(jnp.float32)
    # Re-read x so only one (N, TC) f32 array needs to stay live across the
    # reduction (halves live VMEM footprint -> larger tiles fit).
    y = (x_ref[...].astype(jnp.float32) - mean) * scale + beta
    o_ref[...] = y.astype(o_ref.dtype)


def _bn1d_stats_kernel(x_ref, stats_ref, sum_ref, sq_ref, *, n_rows, tile_rows):
    """Pass 1 of the large-N path: accumulate sum / sum-of-squares over N strips."""
    s = pl.program_id(1)

    @pl.when(s == 0)
    def _init():
        sum_ref[...] = jnp.zeros_like(sum_ref)
        sq_ref[...] = jnp.zeros_like(sq_ref)

    x = x_ref[...].astype(jnp.float32)                       # (TN, TC)
    row = s * tile_rows + lax.broadcasted_iota(jnp.int32, x.shape, 0)
    x = jnp.where(row < n_rows, x, 0.0)                      # mask ragged N strip
    sum_ref[...] += jnp.sum(x, axis=0, keepdims=True)
    sq_ref[...] += jnp.sum(x * x, axis=0, keepdims=True)

    @pl.when(s == pl.num_programs(1) - 1)
    def _finalize():
        inv_n = 1.0 / n_rows
        mean = sum_ref[...] * inv_n
        var = jnp.maximum(sq_ref[...] * inv_n - mean * mean, 0.0)
        stats_ref[0:1, :] = mean
        stats_ref[1:2, :] = lax.rsqrt(var + EPS)


def _bn1d_apply_kernel(x_ref, stats_ref, gamma_ref, beta_ref, o_ref):
    """Pass 2 of the large-N path: normalize with precomputed statistics."""
    mean = stats_ref[0:1, :]
    inv_std = stats_ref[1:2, :]
    scale = inv_std * gamma_ref[...].astype(jnp.float32)
    beta = beta_ref[...].astype(jnp.float32)
    y = (x_ref[...].astype(jnp.float32) - mean) * scale + beta
    o_ref[...] = y.astype(o_ref.dtype)


# ----------------------------- wrapper -------------------------------------


def switch_batchnorm1d_forward(x, gamma, beta, *, row_tile_override=None):
    """x: (N, C), gamma/beta: (C,) -> (N, C), training-mode BatchNorm1d forward."""
    if x.ndim != 2:
        raise ValueError("Only the 2-D (N, C) BatchNorm1d input is supported.")
    N, C = x.shape
    vmem_limit = _vmem_limit_bytes()
    mode, tn, tc = _choose_tiles(N, C, x.dtype, x.dtype, vmem_limit, row_tile_override)

    gamma2 = gamma.reshape(1, C).astype(jnp.float32)
    beta2 = beta.reshape(1, C).astype(jnp.float32)
    num_c = pl.cdiv(C, tc)

    if mode == "one_pass":
        return pl.pallas_call(
            _bn1d_onepass_kernel,
            out_shape=jax.ShapeDtypeStruct((N, C), x.dtype),
            grid_spec=pltpu.PrefetchScalarGridSpec(
                num_scalar_prefetch=0,
                grid=(num_c,),
                in_specs=[
                    pl.BlockSpec((N, tc), lambda j: (0, j)),
                    pl.BlockSpec((1, tc), lambda j: (0, j)),
                    pl.BlockSpec((1, tc), lambda j: (0, j)),
                ],
                out_specs=pl.BlockSpec((N, tc), lambda j: (0, j)),
            ),
            compiler_params=pltpu.CompilerParams(
                dimension_semantics=("parallel",),
                vmem_limit_bytes=vmem_limit,
            ),
        )(x, gamma2, beta2)

    # --- two-pass large-N path ---
    num_n = pl.cdiv(N, tn)

    stats = pl.pallas_call(
        functools.partial(_bn1d_stats_kernel, n_rows=N, tile_rows=tn),
        out_shape=jax.ShapeDtypeStruct((2, C), jnp.float32),
        grid_spec=pltpu.PrefetchScalarGridSpec(
            num_scalar_prefetch=0,
            grid=(num_c, num_n),
            in_specs=[pl.BlockSpec((tn, tc), lambda j, s: (s, j))],
            out_specs=pl.BlockSpec((2, tc), lambda j, s: (0, j)),
            scratch_shapes=[
                pltpu.VMEM((1, tc), jnp.float32),
                pltpu.VMEM((1, tc), jnp.float32),
            ],
        ),
        compiler_params=pltpu.CompilerParams(
            dimension_semantics=("parallel", "arbitrary"),
            vmem_limit_bytes=vmem_limit,
        ),
    )(x)

    return pl.pallas_call(
        _bn1d_apply_kernel,
        out_shape=jax.ShapeDtypeStruct((N, C), x.dtype),
        grid_spec=pltpu.PrefetchScalarGridSpec(
            num_scalar_prefetch=0,
            grid=(num_c, num_n),
            in_specs=[
                pl.BlockSpec((tn, tc), lambda j, s: (s, j)),
                pl.BlockSpec((2, tc), lambda j, s: (0, j)),
                pl.BlockSpec((1, tc), lambda j, s: (0, j)),
                pl.BlockSpec((1, tc), lambda j, s: (0, j)),
            ],
            out_specs=pl.BlockSpec((tn, tc), lambda j, s: (s, j)),
        ),
        compiler_params=pltpu.CompilerParams(
            dimension_semantics=("parallel", "parallel"),
            vmem_limit_bytes=vmem_limit,
        ),
    )(x, stats, gamma2, beta2)


class SwitchBatchNorm1dPallas:
    """Mirrors the PyTorch module: one BN per bit, forward uses bit_list[-1]."""

    def __init__(self, num_features, bit_list):
        self.bit_list = bit_list
        self.abit = bit_list[-1]
        self.wbit = bit_list[-1]
        if self.abit != self.wbit:
            raise ValueError("Currenty only support same activation and weight bit width!")
        # nn.BatchNorm1d default init: weight = ones, bias = zeros (per bit).
        self.params = {
            str(b): (
                jnp.ones((num_features,), jnp.float32),
                jnp.zeros((num_features,), jnp.float32),
            )
            for b in bit_list
        }

    def __call__(self, x):
        gamma, beta = self.params[str(self.abit)]
        return switch_batchnorm1d_forward(x, gamma, beta)


def _reference(x, gamma, beta):
    mean = jnp.mean(x, axis=0, keepdims=True)
    var = jnp.mean((x - mean) ** 2, axis=0, keepdims=True)
    return (x - mean) / jnp.sqrt(var + EPS) * gamma[None, :] + beta[None, :]


if __name__ == "__main__":
    key = jax.random.PRNGKey(0)
    bit_list = [2, 4, 8]

    # 1) Small module-level case (batch=8, num_features=32).
    N, C = 8, 32
    x = jax.random.normal(key, (N, C), dtype=jnp.float32) * 3.0 + 1.5
    module = SwitchBatchNorm1dPallas(C, bit_list)
    y = jax.block_until_ready(module(x))
    gamma, beta = module.params[str(module.abit)]
    y_ref = _reference(x, gamma, beta)
    assert y.shape == (N, C) and y.dtype == jnp.float32
    assert jnp.allclose(y, y_ref, atol=1e-5, rtol=1e-5), float(jnp.max(jnp.abs(y - y_ref)))

    # 2) Larger lane-dense case exercising a multi-tile feature grid.
    N2, C2 = 16, 1024
    x2 = jax.random.normal(jax.random.PRNGKey(1), (N2, C2), dtype=jnp.float32) * 2.0 - 0.5
    g2 = jnp.linspace(0.5, 1.5, C2, dtype=jnp.float32)
    b2 = jnp.linspace(-0.2, 0.2, C2, dtype=jnp.float32)
    y2 = jax.block_until_ready(switch_batchnorm1d_forward(x2, g2, b2))
    y2_ref = _reference(x2, g2, b2)
    assert jnp.allclose(y2, y2_ref, atol=1e-4, rtol=1e-4), float(jnp.max(jnp.abs(y2 - y2_ref)))

    # 3) Ragged feature count (C % 128 != 0) with NO wrapper pad/slice.
    N3, C3 = 32, 200
    x3 = jax.random.normal(jax.random.PRNGKey(2), (N3, C3), dtype=jnp.float32) * 1.3 + 0.7
    g3 = jnp.linspace(0.8, 1.2, C3, dtype=jnp.float32)
    b3 = jnp.linspace(-0.1, 0.1, C3, dtype=jnp.float32)
    y3 = jax.block_until_ready(switch_batchnorm1d_forward(x3, g3, b3))
    y3_ref = _reference(x3, g3, b3)
    assert jnp.allclose(y3, y3_ref, atol=1e-4, rtol=1e-4), float(jnp.max(jnp.abs(y3 - y3_ref)))

    # 4) Two-pass large-N fallback (forced via a small row tile), ragged N and C.
    N4, C4 = 50, 300
    x4 = jax.random.normal(jax.random.PRNGKey(3), (N4, C4), dtype=jnp.float32) * 2.0 + 3.0
    g4 = jnp.linspace(0.5, 1.5, C4, dtype=jnp.float32)
    b4 = jnp.linspace(-0.3, 0.3, C4, dtype=jnp.float32)
    y4 = jax.block_until_ready(
        switch_batchnorm1d_forward(x4, g4, b4, row_tile_override=16)
    )
    y4_ref = _reference(x4, g4, b4)
    assert jnp.allclose(y4, y4_ref, atol=2e-4, rtol=2e-4), float(jnp.max(jnp.abs(y4 - y4_ref)))

    print("KERNEL_OK")
</pallas_src>

<mosaic_0001>
module attributes {stable_mosaic.version = 11 : i64} {
  func.func @_bn1d_onepass_kernel(%arg0: i32, %arg1: memref<8x32xf32, #tpu.memory_space<vmem>>, %arg2: memref<1x32xf32, #tpu.memory_space<vmem>>, %arg3: memref<1x32xf32, #tpu.memory_space<vmem>>, %arg4: memref<8x32xf32, #tpu.memory_space<vmem>>) attributes {dimension_semantics = [#tpu.dimension_semantics<parallel>], iteration_bounds = array<i64: 1>, scalar_prefetch = 0 : i64, scratch_operands = 0 : i64, tpu.core_type = #tpu.core_type<tc>, window_params = [{transform_indices = @transform_0, window_bounds = array<i64: 8, 32>}, {transform_indices = @transform_1, window_bounds = array<i64: 1, 32>}, {transform_indices = @transform_2, window_bounds = array<i64: 1, 32>}, {transform_indices = @transform_3, window_bounds = array<i64: 8, 32>}]} {
    %c0 = arith.constant 0 : index
    %c0_0 = arith.constant 0 : index
    %0 = vector.load %arg1[%c0, %c0_0] : memref<8x32xf32, #tpu.memory_space<vmem>>, vector<8x32xf32>
    %cst = arith.constant dense<0.000000e+00> : vector<32xf32>
    %1 = vector.multi_reduction <add>, %0, %cst [0] : vector<8x32xf32> to vector<32xf32>
    %2 = vector.shape_cast %1 : vector<32xf32> to vector<1x32xf32>
    %cst_1 = arith.constant 8.000000e+00 : f32
    %3 = vector.broadcast %cst_1 : f32 to vector<1x32xf32>
    %4 = arith.divf %2, %3 : vector<1x32xf32>
    %5 = vector.broadcast %4 : vector<1x32xf32> to vector<8x32xf32>
    %6 = arith.subf %0, %5 : vector<8x32xf32>
    %7 = arith.mulf %6, %6 : vector<8x32xf32>
    %cst_2 = arith.constant dense<0.000000e+00> : vector<32xf32>
    %8 = vector.multi_reduction <add>, %7, %cst_2 [0] : vector<8x32xf32> to vector<32xf32>
    %9 = vector.shape_cast %8 : vector<32xf32> to vector<1x32xf32>
    %cst_3 = arith.constant 8.000000e+00 : f32
    %10 = vector.broadcast %cst_3 : f32 to vector<1x32xf32>
    %11 = arith.divf %9, %10 : vector<1x32xf32>
    %cst_4 = arith.constant 9.99999974E-6 : f32
    %12 = vector.broadcast %cst_4 : f32 to vector<1x32xf32>
    %13 = arith.addf %11, %12 : vector<1x32xf32>
    %14 = math.rsqrt %13 : vector<1x32xf32>
    %c0_5 = arith.constant 0 : index
    %c0_6 = arith.constant 0 : index
    %15 = vector.load %arg2[%c0_5, %c0_6] : memref<1x32xf32, #tpu.memory_space<vmem>>, vector<1x32xf32>
    %16 = arith.mulf %14, %15 : vector<1x32xf32>
    %c0_7 = arith.constant 0 : index
    %c0_8 = arith.constant 0 : index
    %17 = vector.load %arg3[%c0_7, %c0_8] : memref<1x32xf32, #tpu.memory_space<vmem>>, vector<1x32xf32>
    %c0_9 = arith.constant 0 : index
    %c0_10 = arith.constant 0 : index
    %18 = vector.load %arg1[%c0_9, %c0_10] : memref<8x32xf32, #tpu.memory_space<vmem>>, vector<8x32xf32>
    %19 = vector.broadcast %4 : vector<1x32xf32> to vector<8x32xf32>
    %20 = arith.subf %18, %19 : vector<8x32xf32>
    %21 = vector.broadcast %16 : vector<1x32xf32> to vector<8x32xf32>
    %22 = arith.mulf %20, %21 : vector<8x32xf32>
    %23 = vector.broadcast %17 : vector<1x32xf32> to vector<8x32xf32>
    %24 = arith.addf %22, %23 : vector<8x32xf32>
    %c0_11 = arith.constant 0 : index
    %c0_12 = arith.constant 0 : index
    %25 = vector.load %arg4[%c0_11, %c0_12] : memref<8x32xf32, #tpu.memory_space<vmem>>, vector<8x32xf32>
    tpu.vector_store %arg4[%c0_11, %c0_12], %24 {strides = array<i32>} : memref<8x32xf32, #tpu.memory_space<vmem>>, vector<8x32xf32>,
    return
  }
  func.func @transform_0(%arg0: i32) -> (i32, i32) {
    %c0_i32 = arith.constant 0 : i32
    %c0_i32_0 = arith.constant 0 : i32
    return %c0_i32, %arg0 : i32, i32
  }
  func.func @transform_1(%arg0: i32) -> (i32, i32) {
    %c0_i32 = arith.constant 0 : i32
    %c0_i32_0 = arith.constant 0 : i32
    return %c0_i32, %arg0 : i32, i32
  }
  func.func @transform_2(%arg0: i32) -> (i32, i32) {
    %c0_i32 = arith.constant 0 : i32
    %c0_i32_0 = arith.constant 0 : i32
    return %c0_i32, %arg0 : i32, i32
  }
  func.func @transform_3(%arg0: i32) -> (i32, i32) {
    %c0_i32 = arith.constant 0 : i32
    %c0_i32_0 = arith.constant 0 : i32
    return %c0_i32, %arg0 : i32, i32
  }
}

</mosaic_0001>

<llo_original>
// kernel: tpu_custom_call.1
$region0: #{tpu_custom_call.1}
  #allocation0 [shape = 'u32[]', space=smem, size = 0x4, offset = 0x4, fixed_abs, tag = 'smem constant byte address 0x4 - core index']
  #allocation1 [shape = 'u32[144,128]{1,0:T(1,128)}', space=vmem, size = 0x12000, scoped, tag = 'internal scratch']
  %s0 = inlined_call_operand.hbm [shape: f32[8,32], index: 0, kind: input, shape index: {}]
  %s1 = inlined_call_operand.vmem [shape: f32[1,32], index: 1, kind: input, shape index: {}]
  %s2 = inlined_call_operand.vmem [shape: f32[1,32], index: 2, kind: input, shape index: {}]
  %s3 = inlined_call_operand.hbm [shape: f32[8,32], index: 3, kind: output, shape index: {}]
  %s4 = sld [smem:[#allocation0]]
  $region26: #{tpu_custom_call.1} parent=0
    _
  %s6 = ssub.s32 1, %s4
  %s7 = scalar_select 0, %s6, %s4
  $region1: #{tpu_custom_call.1} parent=0
    #allocation2 [shape = 'u8[4096]{0}', space=vmem, size = 0x1000, scoped, tag = 'input window, operand 0, single buffered']
    #allocation3 [shape = 's32[1]{0}', space=sflag, size = 0x4, scoped, tag = 'scoped memory for tpu_custom_call.1']
    #allocation4 [shape = 's32[1]{0}', space=sflag, size = 0x4, scoped, tag = 'scoped memory for tpu_custom_call.1']
    #allocation5 [shape = 'u8[4096]{0}', space=vmem, size = 0x1000, scoped, tag = 'output window, operand 0, single buffered']
    %8 = vsyncpa [#allocation3], 0
    %9 = vsyncpa [#allocation4], 0
    // Predicated region
    $region2: #{tpu_custom_call.1} parent=1 // pred_check
      _
    $region3: #{tpu_custom_call.1} parent=1 // pred_check_branch
      %11 = sbr.rel (0) target = $region5
    $region4: #{tpu_custom_call.1} parent=1 // pred_region
      %s13 = ssub.s32 128, 128
      %14 = vsyncadd [#allocation3], %s13
      %s16 = sshll.u32 [#allocation2], 4
      %s17 = int_to_ptr.vmem [resolvable:$true] %s16
      %19 = dma.hbm_to_vmem [thread:$0]  %s0, 128, %s17, [#allocation3]
    $region5: #{tpu_custom_call.1} parent=1 // pred_fallthru
      _
    // Predicated region
    $region6: #{tpu_custom_call.1} parent=1 // pred_check
      _
    $region7: #{tpu_custom_call.1} parent=1 // pred_check_branch
      %21 = sbr.rel (0) target = $region9
    $region8: #{tpu_custom_call.1} parent=1 // pred_region
      _
    $region9: #{tpu_custom_call.1} parent=1 // pred_fallthru
      _
    // Predicated region
    $region10: #{tpu_custom_call.1} parent=1 // pred_check
      _
    $region11: #{tpu_custom_call.1} parent=1 // pred_check_branch
      %23 = sbr.rel (0) target = $region13
    $region12: #{tpu_custom_call.1} parent=1 // pred_region
      _
    $region13: #{tpu_custom_call.1} parent=1 // pred_fallthru
      _
    // Predicated region
    $region14: #{tpu_custom_call.1} parent=1 // pred_check
      _
    $region15: #{tpu_custom_call.1} parent=1 // pred_check_branch
      %25 = sbr.rel (0) target = $region17
    $region16: #{tpu_custom_call.1} parent=1 // pred_region
      %26 = dma.done [#allocation3], 128
    $region17: #{tpu_custom_call.1} parent=1 // pred_fallthru
      _
    %v27 = vld [vmem:[#allocation2] sm:$0xff]
    %vm28 = vcmask 261120
    %v29 = vsel %vm28, %v27, 0.0
    %v30 = vrot.slane %v29, 4
    %v31 = vadd.f32 %v29, %v30
    %v32 = vrot.slane %v31, 2
    %v33 = vadd.f32 %v31, %v32
    %v34 = vrot.slane %v33, 1
    %v35 = vadd.f32 %v33, %v34
    %v36 = vrcp.pop 8.0
    %v37 = vmul.f32 %v35, %v36
    %v38 = vsub.f32 %v27, %v37
    %v39 = vmul.f32 %v38, %v38
    %v40 = vsel %vm28, %v39, 0.0
    %v41 = vrot.slane %v40, 4
    %v42 = vadd.f32 %v40, %v41
    %v43 = vrot.slane %v42, 2
    %v44 = vadd.f32 %v42, %v43
    %v45 = vrot.slane %v44, 1
    %v46 = vadd.f32 %v44, %v45
    %v47 = vmul.f32 %v46, %v36
    %v48 = vadd.f32 %v47, 1e-05
    %v49 = vrsqrt.pop %v48
    %v50 = vld [vmem:[%s1] sm:$0x1]
    %v51 = vmul.f32 %v49, %v50
    %v52 = vld [vmem:[%s2] sm:$0x1]
    %v53 = vlaneseq
    %v54 = vshrl.u32 %v53, 7
    %v55 = vsub.s32 0, %v54
    %v56 = vrot.slane %v51, %v55
    %v57 = vmul.f32 %v38, %v56
    %v59 = vlaneseq
    %v60 = vshrl.u32 %v59, 7
    %v61 = vsub.s32 0, %v60
    %v62 = vrot.slane %v52, %v61
    %v64 = vadd.f32 %v57, %v62
    %65 = vst.msk [vmem:[#allocation5] sm:$0xff] %vm28, %v64
    // Predicated region
    $region18: #{tpu_custom_call.1} parent=1 // pred_check
      _
    $region19: #{tpu_custom_call.1} parent=1 // pred_check_branch
      %67 = sbr.rel (0) target = $region21
    $region20: #{tpu_custom_call.1} parent=1 // pred_region
      %s69 = ssub.s32 128, 128
      %70 = vsyncadd [#allocation4], %s69
      %s72 = sshll.u32 [#allocation5], 4
      %s73 = int_to_ptr.vmem [resolvable:$true] %s72
      %75 = dma.vmem_to_hbm [thread:$0]  %s73, 128, %s3, [#allocation4]
    $region21: #{tpu_custom_call.1} parent=1 // pred_fallthru
      _
    // Predicated region
    $region22: #{tpu_custom_call.1} parent=1 // pred_check
      _
    $region23: #{tpu_custom_call.1} parent=1 // pred_check_branch
      %77 = sbr.rel (0) target = $region25
    $region24: #{tpu_custom_call.1} parent=1 // pred_region
      %78 = dma.done [#allocation4], 128
    $region25: #{tpu_custom_call.1} parent=1 // pred_fallthru
      _
    %79 = vsyncpa [#allocation3], 1
    %80 = vsyncpa [#allocation4], 1

</llo_original>
